<compile_context>
chip_gen: v7x
topology: tpu7x:2x2x1
jax: 0.10.0
libtpu: 0.0.40
codegen_flags: <defaults>
</compile_context>

<pallas_src>
import functools

import jax
import jax.numpy as jnp
from jax.experimental import pallas as pl
from jax.experimental.pallas import tpu as pltpu

# per-sample statistics (second axis of the accumulator slab)
#   0: sum |x - t|            (L1)
#   1: sum BCE terms          (BCE, PyTorch log clamped to >= -100)
#   2: sum x * t              (dice numerator / jaccard intersection)
#   3: sum x * x              (dice)
#   4: sum t * t              (dice)
#   5: sum x                  (jaccard union)
#   6: sum t                  (jaccard union)
_NSTATS = 7
_LANE = 128
_SUB = 8
_CHUNK = 64  # rows per inner-loop chunk (= 8 sublane slabs per sample)


def _loss_stats_kernel(x_ref, t_ref, out_ref):
    # grid = (num_splits [parallel], blocks_per_split [arbitrary reduction])
    k = pl.program_id(1)

    @pl.when(k == 0)
    def _():
        out_ref[...] = jnp.zeros_like(out_ref)

    b, rows, lanes = x_ref.shape
    chunk = _CHUNK if rows % _CHUNK == 0 else _SUB
    n_chunks = rows // chunk

    # Walk the block chunk-by-chunk so intermediates stay vreg-sized; the
    # accumulator slab lives in the (VMEM-resident) output block.
    @pl.loop(0, n_chunks)
    def _(c):
        r0 = pl.multiple_of(c * chunk, chunk)
        x = x_ref[:, pl.ds(r0, chunk), :].astype(jnp.float32)  # (B, chunk, 128)
        t = t_ref[:, pl.ds(r0, chunk), :].astype(jnp.float32)

        # Regroup rows into whole (8,128) vreg slabs; summing over the slab
        # axis (axis=1) is pure VPU adds — no per-step cross-lane reductions.
        x4 = x.reshape(b, chunk // _SUB, _SUB, lanes)
        t4 = t.reshape(b, chunk // _SUB, _SUB, lanes)

        abs_d = jnp.sum(jnp.abs(x4 - t4), axis=1)

        # nn.BCELoss with probability inputs; logs clamped to >= -100 like
        # PyTorch.  Rearranged as -(t*(log x - log(1-x)) + log(1-x)) to save
        # one multiply per element.
        log_x = jnp.maximum(jnp.log(x4), -100.0)
        log_1mx = jnp.maximum(jnp.log(1.0 - x4), -100.0)
        bce = jnp.sum(-(t4 * (log_x - log_1mx) + log_1mx), axis=1)

        xt = jnp.sum(x4 * t4, axis=1)
        xx = jnp.sum(x4 * x4, axis=1)
        tt = jnp.sum(t4 * t4, axis=1)
        sx = jnp.sum(x4, axis=1)
        st = jnp.sum(t4, axis=1)

        # Accumulate per-(sample, sublane, lane) partial sums; lane-dense.
        out_ref[0, 0] += abs_d
        out_ref[0, 1] += bce
        out_ref[0, 2] += xt
        out_ref[0, 3] += xx
        out_ref[0, 4] += tt
        out_ref[0, 5] += sx
        out_ref[0, 6] += st


@functools.partial(jax.jit, static_argnames=("block_bytes",))
def loss_doc_forward(ori, mid_out, gt, block_bytes=2 * 1024 * 1024):
    """Replicates Loss_Doc.forward(ori, mid_out, gt).

    `ori` is accepted for signature fidelity but (as in the PyTorch module's
    forward) is unused by the returned losses.
    Returns (l1_loss, bce_loss, dice_loss, jaccard_loss) as f32 scalars.
    """
    del ori  # unused by the reference forward

    b = mid_out.shape[0]
    x = mid_out.reshape(b, -1)  # native dtype; kernel casts to f32
    t = gt.reshape(b, -1)
    n = x.shape[1]

    # ---- tiling: (B, rows, 128) with rows tiled in multi-MiB aligned blocks
    rows_total = pl.cdiv(n, _LANE)
    unit = _CHUNK if rows_total >= _CHUNK else _SUB

    # rows per block, sized for ~block_bytes per f32 input block
    rows_blk_max = max(unit, (block_bytes // (b * _LANE * 4)) // unit * unit)
    # split the feature axis in two when there is enough work: lets the second
    # TensorCore participate on v7x; harmless elsewhere.
    num_splits = 2 if rows_total >= 2 * rows_blk_max else 1
    blocks_per_split = pl.cdiv(rows_total, num_splits * rows_blk_max)
    # shrink rows_blk to the smallest multiple of `unit` that still covers the
    # input, minimizing zero padding.
    rows_blk = pl.cdiv(pl.cdiv(rows_total, num_splits * blocks_per_split), unit) * unit
    rows_padded = num_splits * blocks_per_split * rows_blk

    n_padded = rows_padded * _LANE
    if n_padded != n:
        # zero padding contributes 0 to every accumulated statistic
        x = jnp.pad(x, ((0, 0), (0, n_padded - n)))
        t = jnp.pad(t, ((0, 0), (0, n_padded - n)))
    x3 = x.reshape(b, rows_padded, _LANE)
    t3 = t.reshape(b, rows_padded, _LANE)

    in_map = lambda p, k: (0, p * blocks_per_split + k, 0)

    stats_slab = pl.pallas_call(
        _loss_stats_kernel,
        out_shape=jax.ShapeDtypeStruct(
            (num_splits, _NSTATS, b, _SUB, _LANE), jnp.float32
        ),
        grid_spec=pltpu.PrefetchScalarGridSpec(
            num_scalar_prefetch=0,
            grid=(num_splits, blocks_per_split),
            in_specs=[
                pl.BlockSpec((b, rows_blk, _LANE), in_map),
                pl.BlockSpec((b, rows_blk, _LANE), in_map),
            ],
            out_specs=pl.BlockSpec(
                (1, _NSTATS, b, _SUB, _LANE), lambda p, k: (p, 0, 0, 0, 0)
            ),
        ),
        compiler_params=pltpu.CompilerParams(
            dimension_semantics=("parallel", "arbitrary"),
            vmem_limit_bytes=32 * 1024 * 1024,
        ),
    )(x3, t3)

    # Final (cheap) reduction of the tiny slab + scalar combinations in JAX.
    stats = jnp.sum(stats_slab, axis=(0, 3, 4))  # (7, B)
    abs_sum, bce_sum, xt, xx, tt, sx, st = stats

    total_elems = jnp.float32(b * n)

    # nn.L1Loss (mean) and nn.BCELoss (mean)
    l1_loss = jnp.sum(abs_sum) / total_elems
    bce_loss = jnp.sum(bce_sum) / total_elems

    # d_loss (per-sample dice, then mean)
    d = 2.0 * xt / ((xx + 0.001) + (tt + 0.001) + 0.0001)
    dice_loss = 1.0 - jnp.mean(d)

    # jaccard_loss (global)
    smooth = 1e-6
    intersection = jnp.sum(xt)
    union = jnp.sum(sx) + jnp.sum(st) - intersection
    jaccard_loss = 1.0 - (intersection + smooth) / (union + smooth)

    return l1_loss, bce_loss, dice_loss, jaccard_loss


def _loss_doc_reference(mid_out, gt):
    """Pure-JAX reference for a quick correctness check."""
    b = mid_out.shape[0]
    x = mid_out.reshape(b, -1).astype(jnp.float32)
    t = gt.reshape(b, -1).astype(jnp.float32)
    l1 = jnp.mean(jnp.abs(x - t))
    log_x = jnp.maximum(jnp.log(x), -100.0)
    log_1mx = jnp.maximum(jnp.log(1.0 - x), -100.0)
    bce = jnp.mean(-(t * log_x + (1.0 - t) * log_1mx))
    a = jnp.sum(x * t, axis=1)
    bb = jnp.sum(x * x, axis=1) + 0.001
    cc = jnp.sum(t * t, axis=1) + 0.001
    dice = 1.0 - jnp.mean(2.0 * a / (bb + cc + 0.0001))
    smooth = 1e-6
    inter = jnp.sum(x * t)
    union = jnp.sum(x) + jnp.sum(t) - inter
    jac = 1.0 - (inter + smooth) / (union + smooth)
    return l1, bce, dice, jac


if __name__ == "__main__":
    key = jax.random.PRNGKey(0)
    k1, k2, k3 = jax.random.split(key, 3)

    B, C, H, W = 2, 4, 16, 16  # NCHW, flattened N = 1024

    ori = jax.random.normal(k1, (B, C, H, W), dtype=jnp.float32)
    # mid_out must be a probability map in (0, 1) for BCE
    mid_out = jax.nn.sigmoid(jax.random.normal(k2, (B, C, H, W), dtype=jnp.float32))
    # gt in [0, 1]
    gt = jax.random.uniform(k3, (B, C, H, W), dtype=jnp.float32)

    losses = loss_doc_forward(ori, mid_out, gt)
    losses = jax.block_until_ready(losses)

    refs = jax.block_until_ready(_loss_doc_reference(mid_out, gt))
    for got, ref in zip(losses, refs):
        assert jnp.allclose(got, ref, rtol=1e-4, atol=1e-5), (got, ref)

    print("KERNEL_OK")
</pallas_src>

<mosaic_0001>
module attributes {stable_mosaic.version = 11 : i64} {
  func.func @_loss_stats_kernel(%arg0: i32, %arg1: i32, %arg2: memref<2x8x128xf32, #tpu.memory_space<vmem>>, %arg3: memref<2x8x128xf32, #tpu.memory_space<vmem>>, %arg4: memref<1x7x2x8x128xf32, #tpu.memory_space<vmem>>) attributes {dimension_semantics = [#tpu.dimension_semantics<parallel>, #tpu.dimension_semantics<arbitrary>], iteration_bounds = array<i64: 1, 1>, scalar_prefetch = 0 : i64, scratch_operands = 0 : i64, tpu.core_type = #tpu.core_type<tc>, window_params = [{transform_indices = @transform_0, window_bounds = array<i64: 2, 8, 128>}, {transform_indices = @transform_1, window_bounds = array<i64: 2, 8, 128>}, {transform_indices = @transform_2, window_bounds = array<i64: 1, 7, 2, 8, 128>}]} {
    %c0_i32 = arith.constant 0 : i32
    %0 = arith.cmpi eq, %arg1, %c0_i32 : i32
    %1 = arith.extui %0 : i1 to i32
    %c0_i32_0 = arith.constant 0 : i32
    %2 = arith.cmpi ne, %1, %c0_i32_0 : i32
    scf.if %2 {
      %cst_81 = arith.constant 0.000000e+00 : f32
      %80 = vector.broadcast %cst_81 : f32 to vector<1x7x2x8x128xf32>
      %c0_82 = arith.constant 0 : index
      %c0_83 = arith.constant 0 : index
      %c0_84 = arith.constant 0 : index
      %c0_85 = arith.constant 0 : index
      %c0_86 = arith.constant 0 : index
      %81 = vector.load %arg4[%c0_82, %c0_83, %c0_84, %c0_85, %c0_86] : memref<1x7x2x8x128xf32, #tpu.memory_space<vmem>>, vector<1x7x2x8x128xf32>
      tpu.vector_store %arg4[%c0_82, %c0_83, %c0_84, %c0_85, %c0_86], %80 {strides = array<i32>} : memref<1x7x2x8x128xf32, #tpu.memory_space<vmem>>, vector<1x7x2x8x128xf32>,
    } else {
    }
    %c0_i32_1 = arith.constant 0 : i32
    %c1_i32 = arith.constant 1 : i32
    %3 = arith.muli %c0_i32_1, %c1_i32 : i32
    %c0_i32_2 = arith.constant 0 : i32
    %4 = arith.addi %c0_i32_2, %3 : i32
    %c8_i32 = arith.constant 8 : i32
    %5 = arith.muli %4, %c8_i32 : i32
    %6 = tpu.assume_multiple %5, 8 : i32
    %c0 = arith.constant 0 : index
    %7 = arith.index_cast %6 : i32 to index
    %c0_3 = arith.constant 0 : index
    %8 = vector.load %arg2[%c0, %7, %c0_3] : memref<2x8x128xf32, #tpu.memory_space<vmem>>, vector<2x8x128xf32>
    %c0_4 = arith.constant 0 : index
    %9 = arith.index_cast %6 : i32 to index
    %c0_5 = arith.constant 0 : index
    %10 = vector.load %arg3[%c0_4, %9, %c0_5] : memref<2x8x128xf32, #tpu.memory_space<vmem>>, vector<2x8x128xf32>
    %11 = vector.shape_cast %8 : vector<2x8x128xf32> to vector<2x1x8x128xf32>
    %12 = vector.shape_cast %10 : vector<2x8x128xf32> to vector<2x1x8x128xf32>
    %13 = arith.subf %11, %12 : vector<2x1x8x128xf32>
    %14 = math.absf %13 : vector<2x1x8x128xf32>
    %cst = arith.constant dense<0.000000e+00> : vector<2x8x128xf32>
    %15 = vector.multi_reduction <add>, %14, %cst [1] : vector<2x1x8x128xf32> to vector<2x8x128xf32>
    %16 = math.log %11 : vector<2x1x8x128xf32>
    %cst_6 = arith.constant -1.000000e+02 : f32
    %17 = vector.broadcast %cst_6 : f32 to vector<2x1x8x128xf32>
    %18 = arith.maximumf %16, %17 : vector<2x1x8x128xf32>
    %cst_7 = arith.constant 1.000000e+00 : f32
    %19 = vector.broadcast %cst_7 : f32 to vector<2x1x8x128xf32>
    %20 = arith.subf %19, %11 : vector<2x1x8x128xf32>
    %21 = math.log %20 : vector<2x1x8x128xf32>
    %cst_8 = arith.constant -1.000000e+02 : f32
    %22 = vector.broadcast %cst_8 : f32 to vector<2x1x8x128xf32>
    %23 = arith.maximumf %21, %22 : vector<2x1x8x128xf32>
    %24 = arith.subf %18, %23 : vector<2x1x8x128xf32>
    %25 = arith.mulf %12, %24 : vector<2x1x8x128xf32>
    %26 = arith.addf %25, %23 : vector<2x1x8x128xf32>
    %cst_9 = arith.constant 0.000000e+00 : f32
    %27 = vector.broadcast %cst_9 : f32 to vector<2x1x8x128xf32>
    %28 = arith.subf %27, %26 : vector<2x1x8x128xf32>
    %cst_10 = arith.constant dense<0.000000e+00> : vector<2x8x128xf32>
    %29 = vector.multi_reduction <add>, %28, %cst_10 [1] : vector<2x1x8x128xf32> to vector<2x8x128xf32>
    %30 = arith.mulf %11, %12 : vector<2x1x8x128xf32>
    %cst_11 = arith.constant dense<0.000000e+00> : vector<2x8x128xf32>
    %31 = vector.multi_reduction <add>, %30, %cst_11 [1] : vector<2x1x8x128xf32> to vector<2x8x128xf32>
    %32 = arith.mulf %11, %11 : vector<2x1x8x128xf32>
    %cst_12 = arith.constant dense<0.000000e+00> : vector<2x8x128xf32>
    %33 = vector.multi_reduction <add>, %32, %cst_12 [1] : vector<2x1x8x128xf32> to vector<2x8x128xf32>
    %34 = arith.mulf %12, %12 : vector<2x1x8x128xf32>
    %cst_13 = arith.constant dense<0.000000e+00> : vector<2x8x128xf32>
    %35 = vector.multi_reduction <add>, %34, %cst_13 [1] : vector<2x1x8x128xf32> to vector<2x8x128xf32>
    %cst_14 = arith.constant dense<0.000000e+00> : vector<2x8x128xf32>
    %36 = vector.multi_reduction <add>, %11, %cst_14 [1] : vector<2x1x8x128xf32> to vector<2x8x128xf32>
    %cst_15 = arith.constant dense<0.000000e+00> : vector<2x8x128xf32>
    %37 = vector.multi_reduction <add>, %12, %cst_15 [1] : vector<2x1x8x128xf32> to vector<2x8x128xf32>
    %c0_16 = arith.constant 0 : index
    %c0_17 = arith.constant 0 : index
    %c0_18 = arith.constant 0 : index
    %c0_19 = arith.constant 0 : index
    %c0_20 = arith.constant 0 : index
    %38 = vector.load %arg4[%c0_16, %c0_17, %c0_18, %c0_19, %c0_20] : memref<1x7x2x8x128xf32, #tpu.memory_space<vmem>>, vector<1x1x2x8x128xf32>
    %39 = vector.shape_cast %38 : vector<1x1x2x8x128xf32> to vector<2x8x128xf32>
    %40 = arith.addf %39, %15 : vector<2x8x128xf32>
    %c0_21 = arith.constant 0 : index
    %c0_22 = arith.constant 0 : index
    %c0_23 = arith.constant 0 : index
    %c0_24 = arith.constant 0 : index
    %c0_25 = arith.constant 0 : index
    %41 = vector.load %arg4[%c0_21, %c0_22, %c0_23, %c0_24, %c0_25] : memref<1x7x2x8x128xf32, #tpu.memory_space<vmem>>, vector<1x1x2x8x128xf32>
    %42 = vector.shape_cast %41 : vector<1x1x2x8x128xf32> to vector<2x8x128xf32>
    %43 = vector.shape_cast %40 : vector<2x8x128xf32> to vector<1x1x2x8x128xf32>
    tpu.vector_store %arg4[%c0_21, %c0_22, %c0_23, %c0_24, %c0_25], %43 {strides = array<i32>} : memref<1x7x2x8x128xf32, #tpu.memory_space<vmem>>, vector<1x1x2x8x128xf32>,
    %c0_26 = arith.constant 0 : index
    %c1 = arith.constant 1 : index
    %c0_27 = arith.constant 0 : index
    %c0_28 = arith.constant 0 : index
    %c0_29 = arith.constant 0 : index
    %44 = vector.load %arg4[%c0_26, %c1, %c0_27, %c0_28, %c0_29] : memref<1x7x2x8x128xf32, #tpu.memory_space<vmem>>, vector<1x1x2x8x128xf32>
    %45 = vector.shape_cast %44 : vector<1x1x2x8x128xf32> to vector<2x8x128xf32>
    %46 = arith.addf %45, %29 : vector<2x8x128xf32>
    %c0_30 = arith.constant 0 : index
    %c1_31 = arith.constant 1 : index
    %c0_32 = arith.constant 0 : index
    %c0_33 = arith.constant 0 : index
    %c0_34 = arith.constant 0 : index
    %47 = vector.load %arg4[%c0_30, %c1_31, %c0_32, %c0_33, %c0_34] : memref<1x7x2x8x128xf32, #tpu.memory_space<vmem>>, vector<1x1x2x8x128xf32>
    %48 = vector.shape_cast %47 : vector<1x1x2x8x128xf32> to vector<2x8x128xf32>
    %49 = vector.shape_cast %46 : vector<2x8x128xf32> to vector<1x1x2x8x128xf32>
    tpu.vector_store %arg4[%c0_30, %c1_31, %c0_32, %c0_33, %c0_34], %49 {strides = array<i32>} : memref<1x7x2x8x128xf32, #tpu.memory_space<vmem>>, vector<1x1x2x8x128xf32>,
    %c0_35 = arith.constant 0 : index
    %c2 = arith.constant 2 : index
    %c0_36 = arith.constant 0 : index
    %c0_37 = arith.constant 0 : index
    %c0_38 = arith.constant 0 : index
    %50 = vector.load %arg4[%c0_35, %c2, %c0_36, %c0_37, %c0_38] : memref<1x7x2x8x128xf32, #tpu.memory_space<vmem>>, vector<1x1x2x8x128xf32>
    %51 = vector.shape_cast %50 : vector<1x1x2x8x128xf32> to vector<2x8x128xf32>
    %52 = arith.addf %51, %31 : vector<2x8x128xf32>
    %c0_39 = arith.constant 0 : index
    %c2_40 = arith.constant 2 : index
    %c0_41 = arith.constant 0 : index
    %c0_42 = arith.constant 0 : index
    %c0_43 = arith.constant 0 : index
    %53 = vector.load %arg4[%c0_39, %c2_40, %c0_41, %c0_42, %c0_43] : memref<1x7x2x8x128xf32, #tpu.memory_space<vmem>>, vector<1x1x2x8x128xf32>
    %54 = vector.shape_cast %53 : vector<1x1x2x8x128xf32> to vector<2x8x128xf32>
    %55 = vector.shape_cast %52 : vector<2x8x128xf32> to vector<1x1x2x8x128xf32>
    tpu.vector_store %arg4[%c0_39, %c2_40, %c0_41, %c0_42, %c0_43], %55 {strides = array<i32>} : memref<1x7x2x8x128xf32, #tpu.memory_space<vmem>>, vector<1x1x2x8x128xf32>,
    %c0_44 = arith.constant 0 : index
    %c3 = arith.constant 3 : index
    %c0_45 = arith.constant 0 : index
    %c0_46 = arith.constant 0 : index
    %c0_47 = arith.constant 0 : index
    %56 = vector.load %arg4[%c0_44, %c3, %c0_45, %c0_46, %c0_47] : memref<1x7x2x8x128xf32, #tpu.memory_space<vmem>>, vector<1x1x2x8x128xf32>
    %57 = vector.shape_cast %56 : vector<1x1x2x8x128xf32> to vector<2x8x128xf32>
    %58 = arith.addf %57, %33 : vector<2x8x128xf32>
    %c0_48 = arith.constant 0 : index
    %c3_49 = arith.constant 3 : index
    %c0_50 = arith.constant 0 : index
    %c0_51 = arith.constant 0 : index
    %c0_52 = arith.constant 0 : index
    %59 = vector.load %arg4[%c0_48, %c3_49, %c0_50, %c0_51, %c0_52] : memref<1x7x2x8x128xf32, #tpu.memory_space<vmem>>, vector<1x1x2x8x128xf32>
    %60 = vector.shape_cast %59 : vector<1x1x2x8x128xf32> to vector<2x8x128xf32>
    %61 = vector.shape_cast %58 : vector<2x8x128xf32> to vector<1x1x2x8x128xf32>
    tpu.vector_store %arg4[%c0_48, %c3_49, %c0_50, %c0_51, %c0_52], %61 {strides = array<i32>} : memref<1x7x2x8x128xf32, #tpu.memory_space<vmem>>, vector<1x1x2x8x128xf32>,
    %c0_53 = arith.constant 0 : index
    %c4 = arith.constant 4 : index
    %c0_54 = arith.constant 0 : index
    %c0_55 = arith.constant 0 : index
    %c0_56 = arith.constant 0 : index
    %62 = vector.load %arg4[%c0_53, %c4, %c0_54, %c0_55, %c0_56] : memref<1x7x2x8x128xf32, #tpu.memory_space<vmem>>, vector<1x1x2x8x128xf32>
    %63 = vector.shape_cast %62 : vector<1x1x2x8x128xf32> to vector<2x8x128xf32>
    %64 = arith.addf %63, %35 : vector<2x8x128xf32>
    %c0_57 = arith.constant 0 : index
    %c4_58 = arith.constant 4 : index
    %c0_59 = arith.constant 0 : index
    %c0_60 = arith.constant 0 : index
    %c0_61 = arith.constant 0 : index
    %65 = vector.load %arg4[%c0_57, %c4_58, %c0_59, %c0_60, %c0_61] : memref<1x7x2x8x128xf32, #tpu.memory_space<vmem>>, vector<1x1x2x8x128xf32>
    %66 = vector.shape_cast %65 : vector<1x1x2x8x128xf32> to vector<2x8x128xf32>
    %67 = vector.shape_cast %64 : vector<2x8x128xf32> to vector<1x1x2x8x128xf32>
    tpu.vector_store %arg4[%c0_57, %c4_58, %c0_59, %c0_60, %c0_61], %67 {strides = array<i32>} : memref<1x7x2x8x128xf32, #tpu.memory_space<vmem>>, vector<1x1x2x8x128xf32>,
    %c0_62 = arith.constant 0 : index
    %c5 = arith.constant 5 : index
    %c0_63 = arith.constant 0 : index
    %c0_64 = arith.constant 0 : index
    %c0_65 = arith.constant 0 : index
    %68 = vector.load %arg4[%c0_62, %c5, %c0_63, %c0_64, %c0_65] : memref<1x7x2x8x128xf32, #tpu.memory_space<vmem>>, vector<1x1x2x8x128xf32>
    %69 = vector.shape_cast %68 : vector<1x1x2x8x128xf32> to vector<2x8x128xf32>
    %70 = arith.addf %69, %36 : vector<2x8x128xf32>
    %c0_66 = arith.constant 0 : index
    %c5_67 = arith.constant 5 : index
    %c0_68 = arith.constant 0 : index
    %c0_69 = arith.constant 0 : index
    %c0_70 = arith.constant 0 : index
    %71 = vector.load %arg4[%c0_66, %c5_67, %c0_68, %c0_69, %c0_70] : memref<1x7x2x8x128xf32, #tpu.memory_space<vmem>>, vector<1x1x2x8x128xf32>
    %72 = vector.shape_cast %71 : vector<1x1x2x8x128xf32> to vector<2x8x128xf32>
    %73 = vector.shape_cast %70 : vector<2x8x128xf32> to vector<1x1x2x8x128xf32>
    tpu.vector_store %arg4[%c0_66, %c5_67, %c0_68, %c0_69, %c0_70], %73 {strides = array<i32>} : memref<1x7x2x8x128xf32, #tpu.memory_space<vmem>>, vector<1x1x2x8x128xf32>,
    %c0_71 = arith.constant 0 : index
    %c6 = arith.constant 6 : index
    %c0_72 = arith.constant 0 : index
    %c0_73 = arith.constant 0 : index
    %c0_74 = arith.constant 0 : index
    %74 = vector.load %arg4[%c0_71, %c6, %c0_72, %c0_73, %c0_74] : memref<1x7x2x8x128xf32, #tpu.memory_space<vmem>>, vector<1x1x2x8x128xf32>
    %75 = vector.shape_cast %74 : vector<1x1x2x8x128xf32> to vector<2x8x128xf32>
    %76 = arith.addf %75, %37 : vector<2x8x128xf32>
    %c0_75 = arith.constant 0 : index
    %c6_76 = arith.constant 6 : index
    %c0_77 = arith.constant 0 : index
    %c0_78 = arith.constant 0 : index
    %c0_79 = arith.constant 0 : index
    %77 = vector.load %arg4[%c0_75, %c6_76, %c0_77, %c0_78, %c0_79] : memref<1x7x2x8x128xf32, #tpu.memory_space<vmem>>, vector<1x1x2x8x128xf32>
    %78 = vector.shape_cast %77 : vector<1x1x2x8x128xf32> to vector<2x8x128xf32>
    %79 = vector.shape_cast %76 : vector<2x8x128xf32> to vector<1x1x2x8x128xf32>
    tpu.vector_store %arg4[%c0_75, %c6_76, %c0_77, %c0_78, %c0_79], %79 {strides = array<i32>} : memref<1x7x2x8x128xf32, #tpu.memory_space<vmem>>, vector<1x1x2x8x128xf32>,
    %c1_i32_80 = arith.constant 1 : i32
    return
  }
  func.func @transform_0(%arg0: i32, %arg1: i32) -> (i32, i32, i32) {
    %c1_i32 = arith.constant 1 : i32
    %0 = arith.muli %arg0, %c1_i32 : i32
    %1 = arith.addi %0, %arg1 : i32
    %c0_i32 = arith.constant 0 : i32
    %c0_i32_0 = arith.constant 0 : i32
    %c0_i32_1 = arith.constant 0 : i32
    return %c0_i32, %1, %c0_i32_0 : i32, i32, i32
  }
  func.func @transform_1(%arg0: i32, %arg1: i32) -> (i32, i32, i32) {
    %c1_i32 = arith.constant 1 : i32
    %0 = arith.muli %arg0, %c1_i32 : i32
    %1 = arith.addi %0, %arg1 : i32
    %c0_i32 = arith.constant 0 : i32
    %c0_i32_0 = arith.constant 0 : i32
    %c0_i32_1 = arith.constant 0 : i32
    return %c0_i32, %1, %c0_i32_0 : i32, i32, i32
  }
  func.func @transform_2(%arg0: i32, %arg1: i32) -> (i32, i32, i32, i32, i32) {
    %c0_i32 = arith.constant 0 : i32
    %c0_i32_0 = arith.constant 0 : i32
    %c0_i32_1 = arith.constant 0 : i32
    %c0_i32_2 = arith.constant 0 : i32
    %c0_i32_3 = arith.constant 0 : i32
    return %arg0, %c0_i32, %c0_i32_0, %c0_i32_1, %c0_i32_2 : i32, i32, i32, i32, i32
  }
}

</mosaic_0001>

<llo_original>
// kernel: loss_doc_forward.1
$region0: #{loss_doc_forward.1}
  #allocation0 [shape = 'u32[]', space=smem, size = 0x4, offset = 0x4, fixed_abs, tag = 'smem constant byte address 0x4 - core index']
  #allocation1 [shape = 'u32[144,128]{1,0:T(1,128)}', space=vmem, size = 0x12000, scoped, tag = 'internal scratch']
  %s0 = inlined_call_operand.vmem [shape: f32[2,8,128], index: 0, kind: input, shape index: {}]
  %s1 = inlined_call_operand.vmem [shape: f32[2,8,128], index: 1, kind: input, shape index: {}]
  %s2 = inlined_call_operand.vmem [shape: f32[1,7,2,8,128], index: 2, kind: output, shape index: {}]
  %s3 = sld [smem:[#allocation0]]
  $region22: #{loss_doc_forward.1} parent=0
    _
  %s5 = ssub.s32 1, %s3
  %s6 = scalar_select 0, %s5, %s3
  // Predicated region
  $region2: #{loss_doc_forward.1} parent=0 // pred_check
    _
  $region3: #{loss_doc_forward.1} parent=0 // pred_check_branch
    %8 = sbr.rel (0) target = $region5
  $region4: #{loss_doc_forward.1} parent=0 // pred_region
    %s9 = sadd.s32 0, 0
    %p10 = scmp.lt.s32.totalorder %s9, 0
    %s11 = scalar_select %p10, %s9, 0
    %s12 = smul.addr %s11, 8
    %s13 = scalar_lea.vmem %s0, %s12
    %s14 = sadd.s32 0, 0
  $region5: #{loss_doc_forward.1} parent=0 // pred_fallthru
    _
  // Predicated region
  $region6: #{loss_doc_forward.1} parent=0 // pred_check
    _
  $region7: #{loss_doc_forward.1} parent=0 // pred_check_branch
    %16 = sbr.rel (0) target = $region9
  $region8: #{loss_doc_forward.1} parent=0 // pred_region
    %s17 = sadd.s32 0, 0
    %p18 = scmp.lt.s32.totalorder %s17, 0
    %s19 = scalar_select %p18, %s17, 0
    %s20 = smul.addr %s19, 8
    %s21 = scalar_lea.vmem %s1, %s20
    %s22 = sadd.s32 0, 0
  $region9: #{loss_doc_forward.1} parent=0 // pred_fallthru
    _
  %s23 = sadd.s32 0, 0
  %p24 = scmp.lt.s32.totalorder %s23, 0
  %s25 = scalar_select %p24, %s23, 0
  %s26 = smul.addr %s25, 8
  %s27 = scalar_lea.vmem %s0, %s26
  %s28 = sadd.s32 0, 0
  %p29 = scmp.lt.s32.totalorder %s28, 0
  %s30 = scalar_select %p29, %s28, 0
  %s31 = smul.addr %s30, 8
  %s32 = scalar_lea.vmem %s1, %s31
  %s33 = sadd.s32 0, 0
  %p34 = scmp.lt.s32.totalorder %s33, 0
  %s35 = scalar_select %p34, %s33, 0
  %s36 = smul.addr %s35, 8
  %s37 = scalar_lea.vmem %s0, %s36
  %s38 = sadd.s32 0, 0
  %s39 = sadd.s32 0, 0
  %p40 = scmp.lt.s32.totalorder %s39, 0
  %s41 = scalar_select %p40, %s39, 0
  %s42 = smul.addr %s41, 8
  %s43 = scalar_lea.vmem %s1, %s42
  %s44 = sadd.s32 0, 0
  %p45 = scmp.eq.s32.totalorder 0, 0
  // Predicated region
  $region10: #{loss_doc_forward.1} parent=0 // pred_check
    %p46 = pneg %p45
  $region11: #{loss_doc_forward.1} parent=0 // pred_check_branch
    %48 = sbr.rel (%p46) target = $region13
  $region12: #{loss_doc_forward.1} parent=0 // pred_region
    %49 = vst [vmem:[%s2] sm:$0xff] 0.0
    %50 = vst [vmem:[%s2 + $0x8] sm:$0xff] 0.0
    %51 = vst [vmem:[%s2 + $0x10] sm:$0xff] 0.0
    %52 = vst [vmem:[%s2 + $0x18] sm:$0xff] 0.0
    %53 = vst [vmem:[%s2 + $0x20] sm:$0xff] 0.0
    %54 = vst [vmem:[%s2 + $0x28] sm:$0xff] 0.0
    %55 = vst [vmem:[%s2 + $0x30] sm:$0xff] 0.0
    %56 = vst [vmem:[%s2 + $0x38] sm:$0xff] 0.0
    %57 = vst [vmem:[%s2 + $0x40] sm:$0xff] 0.0
    %58 = vst [vmem:[%s2 + $0x48] sm:$0xff] 0.0
    %59 = vst [vmem:[%s2 + $0x50] sm:$0xff] 0.0
    %60 = vst [vmem:[%s2 + $0x58] sm:$0xff] 0.0
    %61 = vst [vmem:[%s2 + $0x60] sm:$0xff] 0.0
    %62 = vst [vmem:[%s2 + $0x68] sm:$0xff] 0.0
  $region13: #{loss_doc_forward.1} parent=0 // pred_fallthru
    _
  %v63 = vld [vmem:[%s37] sm:$0xff]
  %v64 = vld [vmem:[%s37 + $0x8] sm:$0xff]
  %v65 = vld [vmem:[%s43] sm:$0xff]
  %v66 = vld [vmem:[%s43 + $0x8] sm:$0xff]
  %v67 = vsub.f32 %v63, %v65
  %v68 = vsub.f32 %v64, %v66
  %v69 = vand.u32 2147483647, %v67
  %v70 = vand.u32 2147483647, %v68
  %v71 = vadd.f32 %v69, 0.0
  %v72 = vadd.f32 %v70, 0.0
  %v73 = vlog2.pop %v63
  %v74 = vmul.f32 %v73, 0.6931472
  %v75 = vlog2.pop %v64
  %v76 = vmul.f32 %v75, 0.6931472
  %v77 = vmax.f32 %v74, -100.0
  %v78 = vmax.f32 %v76, -100.0
  %v79 = vsub.f32 1.0, %v63
  %v80 = vsub.f32 1.0, %v64
  %v81 = vlog2.pop %v79
  %v82 = vmul.f32 %v81, 0.6931472
  %v83 = vlog2.pop %v80
  %v84 = vmul.f32 %v83, 0.6931472
  %v85 = vmax.f32 %v82, -100.0
  %v86 = vmax.f32 %v84, -100.0
  %v87 = vsub.f32 %v77, %v85
  %v88 = vsub.f32 %v78, %v86
  %v89 = vmul.f32 %v65, %v87
  %v90 = vmul.f32 %v66, %v88
  %v91 = vadd.f32 %v89, %v85
  %v92 = vadd.f32 %v90, %v86
  %v93 = vsub.f32 0.0, %v91
  %v94 = vsub.f32 0.0, %v92
  %v95 = vadd.f32 %v93, 0.0
  %v96 = vadd.f32 %v94, 0.0
  %v97 = vmul.f32 %v63, %v65
  %v98 = vmul.f32 %v64, %v66
  %v99 = vadd.f32 %v97, 0.0
  %v100 = vadd.f32 %v98, 0.0
  %v101 = vmul.f32 %v63, %v63
  %v102 = vmul.f32 %v64, %v64
  %v103 = vadd.f32 %v101, 0.0
  %v104 = vadd.f32 %v102, 0.0
  %v105 = vmul.f32 %v65, %v65
  %v106 = vmul.f32 %v66, %v66
  %v107 = vadd.f32 %v105, 0.0
  %v108 = vadd.f32 %v106, 0.0
  %v109 = vadd.f32 %v63, 0.0
  %v110 = vadd.f32 %v64, 0.0
  %v111 = vadd.f32 %v65, 0.0
  %v112 = vadd.f32 %v66, 0.0
  %v113 = vld [vmem:[%s2] sm:$0xff]
  %v114 = vld [vmem:[%s2 + $0x8] sm:$0xff]
  %v115 = vadd.f32 %v113, %v71
  %v116 = vadd.f32 %v114, %v72
  %117 = vst [vmem:[%s2] sm:$0xff] %v115
  %118 = vst [vmem:[%s2 + $0x8] sm:$0xff] %v116
  %s119 = scalar_lea.vmem %s2, 16
  %v120 = vld [vmem:[%s119] sm:$0xff]
  %v121 = vld [vmem:[%s119 + $0x8] sm:$0xff]
  %v122 = vadd.f32 %v120, %v95
  %v123 = vadd.f32 %v121, %v96
  %124 = vst [vmem:[%s119] sm:$0xff] %v122
  %125 = vst [vmem:[%s119 + $0x8] sm:$0xff] %v123
  %s126 = scalar_lea.vmem %s2, 32
  %v127 = vld [vmem:[%s126] sm:$0xff]
  %v128 = vld [vmem:[%s126 + $0x8] sm:$0xff]
  %v129 = vadd.f32 %v127, %v99
  %v130 = vadd.f32 %v128, %v100
  %131 = vst [vmem:[%s126] sm:$0xff] %v129
  %132 = vst [vmem:[%s126 + $0x8] sm:$0xff] %v130
  %s133 = scalar_lea.vmem %s2, 48
  %v134 = vld [vmem:[%s133] sm:$0xff]
  %v135 = vld [vmem:[%s133 + $0x8] sm:$0xff]
  %v136 = vadd.f32 %v134, %v103
  %v137 = vadd.f32 %v135, %v104
  %138 = vst [vmem:[%s133] sm:$0xff] %v136
  %139 = vst [vmem:[%s133 + $0x8] sm:$0xff] %v137
  %s140 = scalar_lea.vmem %s2, 64
  %v141 = vld [vmem:[%s140] sm:$0xff]
  %v142 = vld [vmem:[%s140 + $0x8] sm:$0xff]
  %v143 = vadd.f32 %v141, %v107
  %v144 = vadd.f32 %v142, %v108
  %145 = vst [vmem:[%s140] sm:$0xff] %v143
  %146 = vst [vmem:[%s140 + $0x8] sm:$0xff] %v144
  %s147 = scalar_lea.vmem %s2, 80
  %v148 = vld [vmem:[%s147] sm:$0xff]
  %v149 = vld [vmem:[%s147 + $0x8] sm:$0xff]
  %v150 = vadd.f32 %v148, %v109
  %v151 = vadd.f32 %v149, %v110
  %152 = vst [vmem:[%s147] sm:$0xff] %v150
  %153 = vst [vmem:[%s147 + $0x8] sm:$0xff] %v151
  %s154 = scalar_lea.vmem %s2, 96
  %v155 = vld [vmem:[%s154] sm:$0xff]
  %v156 = vld [vmem:[%s154 + $0x8] sm:$0xff]
  %v157 = vadd.f32 %v155, %v111
  %v158 = vadd.f32 %v156, %v112
  %159 = vst [vmem:[%s154] sm:$0xff] %v157
  %160 = vst [vmem:[%s154 + $0x8] sm:$0xff] %v158
  // Predicated region
  $region14: #{loss_doc_forward.1} parent=0 // pred_check
    _
  $region15: #{loss_doc_forward.1} parent=0 // pred_check_branch
    %162 = sbr.rel (0) target = $region17
  $region16: #{loss_doc_forward.1} parent=0 // pred_region
    _
  $region17: #{loss_doc_forward.1} parent=0 // pred_fallthru
    _
  // Predicated region
  $region18: #{loss_doc_forward.1} parent=0 // pred_check
    _
  $region19: #{loss_doc_forward.1} parent=0 // pred_check_branch
    %164 = sbr.rel (0) target = $region21
  $region20: #{loss_doc_forward.1} parent=0 // pred_region
    _
  $region21: #{loss_doc_forward.1} parent=0 // pred_fallthru
    _

</llo_original>
